<compile_context>
chip_gen: v7x
topology: tpu7x:2x2x1
jax: 0.10.0
libtpu: 0.0.40
codegen_flags: <defaults>
</compile_context>

<pallas_src>
import functools

import jax
import jax.numpy as jnp
from jax.experimental import pallas as pl
from jax.experimental.pallas import tpu as pltpu

LANE = 128
SUBLANE = 8
_PAD_QUANTUM = 32 * LANE   # pad flat size to a multiple of 32 rows (any dtype's sublane tiling ok)


def _inv_soft_dice_kernel(steps_per_core, block_rows, chunk_rows,
                          scal_ref, x_ref, t_ref, out_ref,
                          acc_num_ref, acc_den_ref):
    """Grid = (num_cores [core-parallel on v7x], steps_per_core [arbitrary]).

    scal_ref (SMEM, int32[2]) = [full_rows, rem]: number of fully-valid
    128-lane rows and valid lanes in the last partial row of the flattened
    input.  Only tiles that can reach past that boundary pay for masking.
    """
    c = pl.program_id(0)          # core (parallel) axis
    i = pl.program_id(1)          # sequential row-walk axis

    @pl.when(i == 0)
    def _():
        acc_num_ref[...] = jnp.zeros_like(acc_num_ref)
        acc_den_ref[...] = jnp.zeros_like(acc_den_ref)

    # Logical (unclamped) position of this tile in the flattened input.
    row0 = (c * steps_per_core + i) * block_rows
    full_rows = scal_ref[0]
    rem = scal_ref[1]

    nchunks = block_rows // chunk_rows
    ngroups = chunk_rows // SUBLANE

    def accumulate(masked):
        def chunk_step(k, carry):
            num_acc, den_acc = carry
            r = pl.multiple_of(k * chunk_rows, chunk_rows)
            x = x_ref[pl.ds(r, chunk_rows), :].astype(jnp.float32)
            t = t_ref[pl.ds(r, chunk_rows), :].astype(jnp.float32)
            # iflat = 1 - sigmoid(x) = sigmoid(-x) = 1 / (1 + exp(x)); exp/recip -> EUP.
            iflat = pl.reciprocal(1.0 + jnp.exp(x), approx=False)
            tflat = 1.0 - t
            if masked:
                grow = row0 + r + jax.lax.broadcasted_iota(
                    jnp.int32, (chunk_rows, LANE), 0)
                lidx = jax.lax.broadcasted_iota(jnp.int32, (chunk_rows, LANE), 1)
                valid = (grow < full_rows) | ((grow == full_rows) & (lidx < rem))
                iflat = jnp.where(valid, iflat, 0.0)
                tflat = jnp.where(valid, tflat, 0.0)
            num = (iflat * tflat).reshape(ngroups, SUBLANE, LANE)
            den = (iflat + tflat).reshape(ngroups, SUBLANE, LANE)
            return (num_acc + jnp.sum(num, axis=0),
                    den_acc + jnp.sum(den, axis=0))

        zero = jnp.zeros((SUBLANE, LANE), jnp.float32)
        num, den = jax.lax.fori_loop(0, nchunks, chunk_step, (zero, zero))
        acc_num_ref[...] += num
        acc_den_ref[...] += den

    # Masked path only where the tile can reach the data boundary (this also
    # covers redundant clamped steps, whose logical row0 is past the data).
    needs_mask = row0 + block_rows > full_rows

    @pl.when(needs_mask)
    def _():
        accumulate(masked=True)

    @pl.when(jnp.logical_not(needs_mask))
    def _():
        accumulate(masked=False)

    @pl.when(i == pl.num_programs(1) - 1)
    def _():
        # One cross-lane reduce per accumulator per core, epilogue only.
        out_ref[0, 0] = jnp.sum(acc_num_ref[...])
        out_ref[0, 1] = jnp.sum(acc_den_ref[...])


def _tpu_device_kind():
    try:
        d = jax.devices()[0]
        if d.platform == "tpu":
            return d.device_kind.lower()
    except Exception:
        pass
    return ""


def inv_soft_dice_loss(logits, targets, *, block_rows=None, num_cores=None,
                       chunk_rows=128, smooth=1.0):
    """Pallas implementation of InvSoftDiceLoss.forward (returns a scalar f32)."""
    assert logits.shape == targets.shape
    n = logits.size

    kind = _tpu_device_kind()
    is_v7 = "v7" in kind
    if num_cores is None:
        num_cores = 2 if is_v7 else 1           # v5e/v6e: 1 TensorCore per chip
    if block_rows is None:
        block_rows = 8192 if is_v7 else 4096    # 16 MiB / 8 MiB double-buffered f32 inputs

    xf = logits.reshape(-1)
    tf_ = targets.reshape(-1)

    # Lane-dense (rows, 128) slab with rows % 32 == 0 (layout-safe for any dtype).
    # Pad values are irrelevant: the boundary tile is masked in-kernel.
    padded_n = pl.cdiv(n, _PAD_QUANTUM) * _PAD_QUANTUM
    pad = padded_n - n
    if pad:
        xf = jnp.pad(xf, (0, pad))
        tf_ = jnp.pad(tf_, (0, pad))
    rows = padded_n // LANE
    x2 = xf.reshape(rows, LANE)
    t2 = tf_.reshape(rows, LANE)

    # Tile sizing: biggest tile that fits, multiple of 32 sublanes.
    block_rows = max(32, min(block_rows, rows))
    block_rows -= block_rows % 32
    # In-kernel streaming chunk must divide the tile (block_rows is a multiple of 32).
    chunk_rows = max(8, min(chunk_rows, block_rows))
    chunk_rows = max(c for c in (256, 128, 64, 32, 16, 8)
                     if c <= chunk_rows and block_rows % c == 0)

    total_steps = pl.cdiv(rows, block_rows)
    num_cores = max(1, min(num_cores, total_steps))
    steps_per_core = pl.cdiv(total_steps, num_cores)
    last_step = total_steps - 1

    scal = jnp.array([n // LANE, n % LANE], dtype=jnp.int32)

    def in_map(c, i, scal_ref):
        # Clamp so over-assigned steps never issue a fully out-of-bounds DMA;
        # their contribution is zeroed by the masked path.
        return (jnp.minimum(c * steps_per_core + i, last_step), 0)

    kernel = functools.partial(_inv_soft_dice_kernel,
                               steps_per_core, block_rows, chunk_rows)

    if num_cores > 1 and is_v7:
        core_sem = pltpu.CORE_PARALLEL      # shard leading axis across the 2 v7x TCs
    else:
        core_sem = pltpu.PARALLEL

    partials = pl.pallas_call(
        kernel,
        out_shape=jax.ShapeDtypeStruct((num_cores, 2), jnp.float32),
        grid_spec=pltpu.PrefetchScalarGridSpec(
            num_scalar_prefetch=1,
            grid=(num_cores, steps_per_core),
            in_specs=[
                pl.BlockSpec((block_rows, LANE), in_map),
                pl.BlockSpec((block_rows, LANE), in_map),
            ],
            out_specs=pl.BlockSpec(
                (1, 2), lambda c, i, s: (c, 0),
                memory_space=pltpu.MemorySpace.SMEM),
            scratch_shapes=[pltpu.VMEM((SUBLANE, LANE), jnp.float32)] * 2,
        ),
        compiler_params=pltpu.CompilerParams(
            dimension_semantics=(core_sem, pltpu.ARBITRARY)),
    )(scal, x2, t2)

    smooth = jnp.float32(smooth)
    inter = jnp.sum(partials[:, 0])
    den = jnp.sum(partials[:, 1])
    return 1.0 - (2.0 * inter + smooth) / (den + smooth)


def _reference(logits, targets):
    smooth = 1.0
    iflat = 1.0 - jax.nn.sigmoid(logits.reshape(-1).astype(jnp.float32))
    tflat = 1.0 - targets.reshape(-1).astype(jnp.float32)
    inter = jnp.sum(iflat * tflat)
    return 1.0 - (2.0 * inter + smooth) / (jnp.sum(iflat) + jnp.sum(tflat) + smooth)


if __name__ == "__main__":
    key = jax.random.PRNGKey(0)
    k1, k2, k3, k4, k5, k6, k7, k8 = jax.random.split(key, 8)

    # 1) Small UNet-like output: batch=2, channels=4, spatial=16x16 (NCHW), defaults.
    logits = jax.random.normal(k1, (2, 4, 16, 16), dtype=jnp.float32)
    targets = (jax.random.uniform(k2, (2, 4, 16, 16)) > 0.5).astype(jnp.float32)
    loss = jax.block_until_ready(inv_soft_dice_loss(logits, targets))
    ref = _reference(logits, targets)
    assert jnp.allclose(loss, ref, atol=1e-5, rtol=1e-5), (loss, ref)

    # 2) Ragged size (exercises the boundary-tile mask).
    logits2 = jax.random.normal(k3, (2, 1, 17, 23), dtype=jnp.float32)
    targets2 = (jax.random.uniform(k4, (2, 1, 17, 23)) > 0.5).astype(jnp.float32)
    loss2 = jax.block_until_ready(inv_soft_dice_loss(logits2, targets2))
    ref2 = _reference(logits2, targets2)
    assert jnp.allclose(loss2, ref2, atol=1e-5, rtol=1e-5), (loss2, ref2)

    # 3) Multi-step grid, partial edge block (masked boundary), 2-way core split.
    logits3 = jax.random.normal(k5, (2, 4, 64, 80), dtype=jnp.float32)
    targets3 = (jax.random.uniform(k6, (2, 4, 64, 80)) > 0.5).astype(jnp.float32)
    loss3 = jax.block_until_ready(
        inv_soft_dice_loss(logits3, targets3, block_rows=96, num_cores=2))
    ref3 = _reference(logits3, targets3)
    assert jnp.allclose(loss3, ref3, atol=1e-5, rtol=1e-5), (loss3, ref3)

    # 4) Odd step count with 2 cores -> redundant clamped step must contribute 0.
    loss4 = jax.block_until_ready(
        inv_soft_dice_loss(logits3, targets3, block_rows=64, num_cores=2))
    assert jnp.allclose(loss4, ref3, atol=1e-5, rtol=1e-5), (loss4, ref3)

    # 5) Lower-precision streaming: bf16 logits/targets (halves HBM traffic).
    logits5 = jax.random.normal(k7, (2, 4, 32, 32), dtype=jnp.float32).astype(jnp.bfloat16)
    targets5 = (jax.random.uniform(k8, (2, 4, 32, 32)) > 0.5).astype(jnp.bfloat16)
    loss5 = jax.block_until_ready(inv_soft_dice_loss(logits5, targets5))
    ref5 = _reference(logits5, targets5)
    assert jnp.allclose(loss5, ref5, atol=1e-5, rtol=1e-5), (loss5, ref5)

    print("KERNEL_OK")
</pallas_src>

<mosaic_0001>
module attributes {stable_mosaic.version = 11 : i64} {
  func.func @_inv_soft_dice_kernel(%arg0: i32, %arg1: i32, %arg2: memref<2xi32, #tpu.memory_space<smem>>, %arg3: memref<32x128xf32, #tpu.memory_space<vmem>>, %arg4: memref<32x128xf32, #tpu.memory_space<vmem>>, %arg5: memref<1x2xf32, #tpu.memory_space<smem>>, %arg6: memref<8x128xf32, #tpu.memory_space<vmem>>, %arg7: memref<8x128xf32, #tpu.memory_space<vmem>>) attributes {dimension_semantics = [#tpu.dimension_semantics<parallel>, #tpu.dimension_semantics<arbitrary>], iteration_bounds = array<i64: 1, 1>, scalar_prefetch = 1 : i64, scratch_operands = 2 : i64, tpu.core_type = #tpu.core_type<tc>, window_params = [{transform_indices = @transform_0, window_bounds = array<i64: 32, 128>}, {transform_indices = @transform_1, window_bounds = array<i64: 32, 128>}, {transform_indices = @transform_2, window_bounds = array<i64: 1, 2>}]} {
    %c0_i32 = arith.constant 0 : i32
    %0 = arith.cmpi eq, %arg1, %c0_i32 : i32
    %1 = arith.extui %0 : i1 to i32
    %c0_i32_0 = arith.constant 0 : i32
    %2 = arith.cmpi ne, %1, %c0_i32_0 : i32
    scf.if %2 {
      %cst = arith.constant 0.000000e+00 : f32
      %18 = vector.broadcast %cst : f32 to vector<8x128xf32>
      %c0_6 = arith.constant 0 : index
      %c0_7 = arith.constant 0 : index
      %19 = vector.load %arg6[%c0_6, %c0_7] : memref<8x128xf32, #tpu.memory_space<vmem>>, vector<8x128xf32>
      tpu.vector_store %arg6[%c0_6, %c0_7], %18 {strides = array<i32>} : memref<8x128xf32, #tpu.memory_space<vmem>>, vector<8x128xf32>,
      %cst_8 = arith.constant 0.000000e+00 : f32
      %20 = vector.broadcast %cst_8 : f32 to vector<8x128xf32>
      %c0_9 = arith.constant 0 : index
      %c0_10 = arith.constant 0 : index
      %21 = vector.load %arg7[%c0_9, %c0_10] : memref<8x128xf32, #tpu.memory_space<vmem>>, vector<8x128xf32>
      tpu.vector_store %arg7[%c0_9, %c0_10], %20 {strides = array<i32>} : memref<8x128xf32, #tpu.memory_space<vmem>>, vector<8x128xf32>,
    } else {
    }
    %c1_i32 = arith.constant 1 : i32
    %3 = arith.muli %arg0, %c1_i32 : i32
    %4 = arith.addi %3, %arg1 : i32
    %c32_i32 = arith.constant 32 : i32
    %5 = arith.muli %4, %c32_i32 : i32
    %c0 = arith.constant 0 : index
    %6 = memref.load %arg2[%c0] : memref<2xi32, #tpu.memory_space<smem>>
    %c1 = arith.constant 1 : index
    %7 = memref.load %arg2[%c1] : memref<2xi32, #tpu.memory_space<smem>>
    %c32_i32_1 = arith.constant 32 : i32
    %8 = arith.addi %5, %c32_i32_1 : i32
    %9 = arith.cmpi sgt, %8, %6 : i32
    %10 = arith.extui %9 : i1 to i32
    %c0_i32_2 = arith.constant 0 : i32
    %11 = arith.cmpi ne, %10, %c0_i32_2 : i32
    scf.if %11 {
      %cst = arith.constant 0.000000e+00 : f32
      %18 = vector.broadcast %cst : f32 to vector<8x128xf32>
      %c0_i32_6 = arith.constant 0 : i32
      %c32_i32_7 = arith.constant 32 : i32
      %19 = arith.muli %c0_i32_6, %c32_i32_7 : i32
      %20 = tpu.assume_multiple %19, 32 : i32
      %21 = arith.index_cast %20 : i32 to index
      %c0_8 = arith.constant 0 : index
      %22 = vector.load %arg3[%21, %c0_8] : memref<32x128xf32, #tpu.memory_space<vmem>>, vector<32x128xf32>
      %23 = arith.index_cast %20 : i32 to index
      %c0_9 = arith.constant 0 : index
      %24 = vector.load %arg4[%23, %c0_9] : memref<32x128xf32, #tpu.memory_space<vmem>>, vector<32x128xf32>
      %25 = math.exp %22 : vector<32x128xf32>
      %cst_10 = arith.constant 1.000000e+00 : f32
      %26 = vector.broadcast %cst_10 : f32 to vector<32x128xf32>
      %27 = arith.addf %26, %25 : vector<32x128xf32>
      %28 = tpu.reciprocal %27 : vector<32x128xf32> -> vector<32x128xf32>
      %cst_11 = arith.constant 1.000000e+00 : f32
      %29 = vector.broadcast %cst_11 : f32 to vector<32x128xf32>
      %30 = arith.subf %29, %24 : vector<32x128xf32>
      %31 = arith.addi %5, %20 : i32
      %32 = tpu.iota {dimensions = array<i32: 0>} : vector<32x128xi32>
      %33 = vector.broadcast %31 : i32 to vector<32x128xi32>
      %34 = arith.addi %33, %32 : vector<32x128xi32>
      %35 = tpu.iota {dimensions = array<i32: 1>} : vector<32x128xi32>
      %36 = vector.broadcast %6 : i32 to vector<32x128xi32>
      %37 = arith.cmpi slt, %34, %36 : vector<32x128xi32>
      %38 = vector.broadcast %6 : i32 to vector<32x128xi32>
      %39 = arith.cmpi eq, %34, %38 : vector<32x128xi32>
      %40 = vector.broadcast %7 : i32 to vector<32x128xi32>
      %41 = arith.cmpi slt, %35, %40 : vector<32x128xi32>
      %42 = arith.andi %39, %41 : vector<32x128xi1>
      %43 = arith.ori %37, %42 : vector<32x128xi1>
      %cst_12 = arith.constant 0.000000e+00 : f32
      %44 = vector.broadcast %cst_12 : f32 to vector<32x128xf32>
      %45 = arith.select %43, %28, %44 : vector<32x128xi1>, vector<32x128xf32>
      %cst_13 = arith.constant 0.000000e+00 : f32
      %46 = vector.broadcast %cst_13 : f32 to vector<32x128xf32>
      %47 = arith.select %43, %30, %46 : vector<32x128xi1>, vector<32x128xf32>
      %48 = arith.mulf %45, %47 : vector<32x128xf32>
      %49 = vector.shape_cast %48 : vector<32x128xf32> to vector<4x8x128xf32>
      %50 = arith.addf %45, %47 : vector<32x128xf32>
      %51 = vector.shape_cast %50 : vector<32x128xf32> to vector<4x8x128xf32>
      %cst_14 = arith.constant dense<0.000000e+00> : vector<8x128xf32>
      %52 = vector.multi_reduction <add>, %49, %cst_14 [0] : vector<4x8x128xf32> to vector<8x128xf32>
      %53 = arith.addf %18, %52 : vector<8x128xf32>
      %cst_15 = arith.constant dense<0.000000e+00> : vector<8x128xf32>
      %54 = vector.multi_reduction <add>, %51, %cst_15 [0] : vector<4x8x128xf32> to vector<8x128xf32>
      %55 = arith.addf %18, %54 : vector<8x128xf32>
      %c1_i32_16 = arith.constant 1 : i32
      %c0_17 = arith.constant 0 : index
      %c0_18 = arith.constant 0 : index
      %56 = vector.load %arg6[%c0_17, %c0_18] : memref<8x128xf32, #tpu.memory_space<vmem>>, vector<8x128xf32>
      %57 = arith.addf %56, %53 : vector<8x128xf32>
      %c0_19 = arith.constant 0 : index
      %c0_20 = arith.constant 0 : index
      %58 = vector.load %arg6[%c0_19, %c0_20] : memref<8x128xf32, #tpu.memory_space<vmem>>, vector<8x128xf32>
      tpu.vector_store %arg6[%c0_19, %c0_20], %57 {strides = array<i32>} : memref<8x128xf32, #tpu.memory_space<vmem>>, vector<8x128xf32>,
      %c0_21 = arith.constant 0 : index
      %c0_22 = arith.constant 0 : index
      %59 = vector.load %arg7[%c0_21, %c0_22] : memref<8x128xf32, #tpu.memory_space<vmem>>, vector<8x128xf32>
      %60 = arith.addf %59, %55 : vector<8x128xf32>
      %c0_23 = arith.constant 0 : index
      %c0_24 = arith.constant 0 : index
      %61 = vector.load %arg7[%c0_23, %c0_24] : memref<8x128xf32, #tpu.memory_space<vmem>>, vector<8x128xf32>
      tpu.vector_store %arg7[%c0_23, %c0_24], %60 {strides = array<i32>} : memref<8x128xf32, #tpu.memory_space<vmem>>, vector<8x128xf32>,
    } else {
    }
    %true = arith.constant true
    %12 = arith.xori %9, %true : i1
    %13 = arith.extui %12 : i1 to i32
    %c0_i32_3 = arith.constant 0 : i32
    %14 = arith.cmpi ne, %13, %c0_i32_3 : i32
    scf.if %14 {
      %cst = arith.constant 0.000000e+00 : f32
      %18 = vector.broadcast %cst : f32 to vector<8x128xf32>
      %c0_i32_6 = arith.constant 0 : i32
      %c32_i32_7 = arith.constant 32 : i32
      %19 = arith.muli %c0_i32_6, %c32_i32_7 : i32
      %20 = tpu.assume_multiple %19, 32 : i32
      %21 = arith.index_cast %20 : i32 to index
      %c0_8 = arith.constant 0 : index
      %22 = vector.load %arg3[%21, %c0_8] : memref<32x128xf32, #tpu.memory_space<vmem>>, vector<32x128xf32>
      %23 = arith.index_cast %20 : i32 to index
      %c0_9 = arith.constant 0 : index
      %24 = vector.load %arg4[%23, %c0_9] : memref<32x128xf32, #tpu.memory_space<vmem>>, vector<32x128xf32>
      %25 = math.exp %22 : vector<32x128xf32>
      %cst_10 = arith.constant 1.000000e+00 : f32
      %26 = vector.broadcast %cst_10 : f32 to vector<32x128xf32>
      %27 = arith.addf %26, %25 : vector<32x128xf32>
      %28 = tpu.reciprocal %27 : vector<32x128xf32> -> vector<32x128xf32>
      %cst_11 = arith.constant 1.000000e+00 : f32
      %29 = vector.broadcast %cst_11 : f32 to vector<32x128xf32>
      %30 = arith.subf %29, %24 : vector<32x128xf32>
      %31 = arith.mulf %28, %30 : vector<32x128xf32>
      %32 = vector.shape_cast %31 : vector<32x128xf32> to vector<4x8x128xf32>
      %33 = arith.addf %28, %30 : vector<32x128xf32>
      %34 = vector.shape_cast %33 : vector<32x128xf32> to vector<4x8x128xf32>
      %cst_12 = arith.constant dense<0.000000e+00> : vector<8x128xf32>
      %35 = vector.multi_reduction <add>, %32, %cst_12 [0] : vector<4x8x128xf32> to vector<8x128xf32>
      %36 = arith.addf %18, %35 : vector<8x128xf32>
      %cst_13 = arith.constant dense<0.000000e+00> : vector<8x128xf32>
      %37 = vector.multi_reduction <add>, %34, %cst_13 [0] : vector<4x8x128xf32> to vector<8x128xf32>
      %38 = arith.addf %18, %37 : vector<8x128xf32>
      %c1_i32_14 = arith.constant 1 : i32
      %c0_15 = arith.constant 0 : index
      %c0_16 = arith.constant 0 : index
      %39 = vector.load %arg6[%c0_15, %c0_16] : memref<8x128xf32, #tpu.memory_space<vmem>>, vector<8x128xf32>
      %40 = arith.addf %39, %36 : vector<8x128xf32>
      %c0_17 = arith.constant 0 : index
      %c0_18 = arith.constant 0 : index
      %41 = vector.load %arg6[%c0_17, %c0_18] : memref<8x128xf32, #tpu.memory_space<vmem>>, vector<8x128xf32>
      tpu.vector_store %arg6[%c0_17, %c0_18], %40 {strides = array<i32>} : memref<8x128xf32, #tpu.memory_space<vmem>>, vector<8x128xf32>,
      %c0_19 = arith.constant 0 : index
      %c0_20 = arith.constant 0 : index
      %42 = vector.load %arg7[%c0_19, %c0_20] : memref<8x128xf32, #tpu.memory_space<vmem>>, vector<8x128xf32>
      %43 = arith.addf %42, %38 : vector<8x128xf32>
      %c0_21 = arith.constant 0 : index
      %c0_22 = arith.constant 0 : index
      %44 = vector.load %arg7[%c0_21, %c0_22] : memref<8x128xf32, #tpu.memory_space<vmem>>, vector<8x128xf32>
      tpu.vector_store %arg7[%c0_21, %c0_22], %43 {strides = array<i32>} : memref<8x128xf32, #tpu.memory_space<vmem>>, vector<8x128xf32>,
    } else {
    }
    %c0_i32_4 = arith.constant 0 : i32
    %15 = arith.cmpi eq, %arg1, %c0_i32_4 : i32
    %16 = arith.extui %15 : i1 to i32
    %c0_i32_5 = arith.constant 0 : i32
    %17 = arith.cmpi ne, %16, %c0_i32_5 : i32
    scf.if %17 {
      %c0_6 = arith.constant 0 : index
      %c0_7 = arith.constant 0 : index
      %18 = vector.load %arg6[%c0_6, %c0_7] : memref<8x128xf32, #tpu.memory_space<vmem>>, vector<8x128xf32>
      %19 = vector.shape_cast %18 : vector<8x128xf32> to vector<1x8x128xf32>
      %cst = arith.constant dense<0.000000e+00> : vector<1xf32>
      %20 = vector.multi_reduction <add>, %19, %cst [1, 2] : vector<1x8x128xf32> to vector<1xf32>
      %21 = vector.shape_cast %20 : vector<1xf32> to vector<1x1x1xf32>
      %22 = vector.extract %21[0, 0, 0] : f32 from vector<1x1x1xf32>
      %c0_8 = arith.constant 0 : index
      %c0_9 = arith.constant 0 : index
      %23 = memref.load %arg5[%c0_8, %c0_9] : memref<1x2xf32, #tpu.memory_space<smem>>
      memref.store %22, %arg5[%c0_8, %c0_9] : memref<1x2xf32, #tpu.memory_space<smem>>
      %c0_10 = arith.constant 0 : index
      %c0_11 = arith.constant 0 : index
      %24 = vector.load %arg7[%c0_10, %c0_11] : memref<8x128xf32, #tpu.memory_space<vmem>>, vector<8x128xf32>
      %25 = vector.shape_cast %24 : vector<8x128xf32> to vector<1x8x128xf32>
      %cst_12 = arith.constant dense<0.000000e+00> : vector<1xf32>
      %26 = vector.multi_reduction <add>, %25, %cst_12 [1, 2] : vector<1x8x128xf32> to vector<1xf32>
      %27 = vector.shape_cast %26 : vector<1xf32> to vector<1x1x1xf32>
      %28 = vector.extract %27[0, 0, 0] : f32 from vector<1x1x1xf32>
      %c0_13 = arith.constant 0 : index
      %c1_14 = arith.constant 1 : index
      %29 = memref.load %arg5[%c0_13, %c1_14] : memref<1x2xf32, #tpu.memory_space<smem>>
      memref.store %28, %arg5[%c0_13, %c1_14] : memref<1x2xf32, #tpu.memory_space<smem>>
    } else {
    }
    return
  }
  func.func @transform_0(%arg0: i32, %arg1: i32, %arg2: memref<2xi32, #tpu.memory_space<smem>>) -> (i32, i32) {
    %c1_i32 = arith.constant 1 : i32
    %0 = arith.muli %arg0, %c1_i32 : i32
    %1 = arith.addi %0, %arg1 : i32
    %c0_i32 = arith.constant 0 : i32
    %2 = arith.minsi %1, %c0_i32 : i32
    %c0_i32_0 = arith.constant 0 : i32
    %c0_i32_1 = arith.constant 0 : i32
    return %2, %c0_i32_0 : i32, i32
  }
  func.func @transform_1(%arg0: i32, %arg1: i32, %arg2: memref<2xi32, #tpu.memory_space<smem>>) -> (i32, i32) {
    %c1_i32 = arith.constant 1 : i32
    %0 = arith.muli %arg0, %c1_i32 : i32
    %1 = arith.addi %0, %arg1 : i32
    %c0_i32 = arith.constant 0 : i32
    %2 = arith.minsi %1, %c0_i32 : i32
    %c0_i32_0 = arith.constant 0 : i32
    %c0_i32_1 = arith.constant 0 : i32
    return %2, %c0_i32_0 : i32, i32
  }
  func.func @transform_2(%arg0: i32, %arg1: i32, %arg2: memref<2xi32, #tpu.memory_space<smem>>) -> (i32, i32) {
    %c0_i32 = arith.constant 0 : i32
    %c0_i32_0 = arith.constant 0 : i32
    return %arg0, %c0_i32 : i32, i32
  }
}

</mosaic_0001>

<llo_original>
// kernel: tpu_custom_call.1
$region0: #{tpu_custom_call.1}
  #allocation0 [shape = 'u32[]', space=smem, size = 0x4, offset = 0x4, fixed_abs, tag = 'smem constant byte address 0x4 - core index']
  #allocation1 [shape = 'u32[144,128]{1,0:T(1,128)}', space=vmem, size = 0x12000, scoped, tag = 'internal scratch']
  #allocation2 [shape = 'f32[8,128]{1,0:T(8,128)}', space=vmem, size = 0x1000, scoped, tag = 'scratch operand']
  #allocation3 [shape = 'f32[8,128]{1,0:T(8,128)}', space=vmem, size = 0x1000, scoped, tag = 'scratch operand']
  #allocation4 [shape = 's32[1]{0}', space=sflag, size = 0x4, scoped, tag = 'scoped memory for tpu_custom_call.1']
  #allocation5 [shape = 'u8[512]{0}', space=smem, size = 0x200, scoped, tag = 'prefetched SMEM operand 0']
  %s0 = inlined_call_operand.hbm [shape: s32[2], index: 0, kind: input, shape index: {}]
  %s1 = inlined_call_operand.hbm [shape: f32[32,128], index: 1, kind: input, shape index: {}]
  %s2 = inlined_call_operand.hbm [shape: f32[32,128], index: 2, kind: input, shape index: {}]
  %s3 = inlined_call_operand.hbm [shape: f32[1,2], index: 3, kind: output, shape index: {}]
  %s4 = sld [smem:[#allocation0]]
  $region42: #{tpu_custom_call.1} parent=0
    _
  %s6 = ssub.s32 1, %s4
  %s7 = scalar_select 0, %s6, %s4
  %9 = dma.hbm_to_smem %s0, 16, [#allocation5], [#allocation4]
  %10 = dma.done [#allocation4], 16
  %11 = sfence
  $region1: #{tpu_custom_call.1} parent=0
    #allocation6 [shape = 'u8[16384]{0}', space=vmem, size = 0x4000, scoped, tag = 'input window, operand 1, single buffered']
    #allocation7 [shape = 's32[1]{0}', space=sflag, size = 0x4, scoped, tag = 'scoped memory for tpu_custom_call.1']
    #allocation8 [shape = 's32[1]{0}', space=sflag, size = 0x4, scoped, tag = 'scoped memory for tpu_custom_call.1']
    #allocation9 [shape = 'u8[16384]{0}', space=vmem, size = 0x4000, scoped, tag = 'input window, operand 2, single buffered']
    #allocation10 [shape = 's32[1]{0}', space=sflag, size = 0x4, scoped, tag = 'scoped memory for tpu_custom_call.1']
    #allocation11 [shape = 'u8[512]{0}', space=smem, size = 0x200, scoped, tag = 'output window, operand 0, single buffered']
    %12 = vsyncpa [#allocation7], 0
    %13 = vsyncpa [#allocation10], 0
    %14 = vsyncpa [#allocation8], 0
    // Predicated region
    $region2: #{tpu_custom_call.1} parent=1 // pred_check
      _
    $region3: #{tpu_custom_call.1} parent=1 // pred_check_branch
      %16 = sbr.rel (0) target = $region5
    $region4: #{tpu_custom_call.1} parent=1 // pred_region
      %s17 = sadd.s32 0, 0
      %p18 = scmp.lt.s32.totalorder %s17, 0
      %s19 = scalar_select %p18, %s17, 0
      %s20 = smul.u32 4, %s19
      %s22 = ssub.s32 512, 512
      %23 = vsyncadd [#allocation7], %s22
      %s24 = smul.addr %s20, 128
      %s25 = scalar_lea.hbm %s1, %s24
      %s26 = sshll.u32 [#allocation6], 4
      %s27 = int_to_ptr.vmem [resolvable:$true] %s26
      %32 = dma.hbm_to_vmem [thread:$0]  %s25, 512, %s27, [#allocation7], 128, 128, 8
    $region5: #{tpu_custom_call.1} parent=1 // pred_fallthru
      _
    // Predicated region
    $region6: #{tpu_custom_call.1} parent=1 // pred_check
      _
    $region7: #{tpu_custom_call.1} parent=1 // pred_check_branch
      %34 = sbr.rel (0) target = $region9
    $region8: #{tpu_custom_call.1} parent=1 // pred_region
      %s35 = sadd.s32 0, 0
      %p36 = scmp.lt.s32.totalorder %s35, 0
      %s37 = scalar_select %p36, %s35, 0
      %s38 = smul.u32 4, %s37
      %s40 = ssub.s32 512, 512
      %41 = vsyncadd [#allocation10], %s40
      %s42 = smul.addr %s38, 128
      %s43 = scalar_lea.hbm %s2, %s42
      %s44 = sshll.u32 [#allocation9], 4
      %s45 = int_to_ptr.vmem [resolvable:$true] %s44
      %50 = dma.hbm_to_vmem [thread:$0]  %s43, 512, %s45, [#allocation10], 128, 128, 8
    $region9: #{tpu_custom_call.1} parent=1 // pred_fallthru
      _
    // Predicated region
    $region10: #{tpu_custom_call.1} parent=1 // pred_check
      _
    $region11: #{tpu_custom_call.1} parent=1 // pred_check_branch
      %52 = sbr.rel (0) target = $region13
    $region12: #{tpu_custom_call.1} parent=1 // pred_region
      %53 = dma.done [#allocation7], 512
    $region13: #{tpu_custom_call.1} parent=1 // pred_fallthru
      _
    // Predicated region
    $region14: #{tpu_custom_call.1} parent=1 // pred_check
      _
    $region15: #{tpu_custom_call.1} parent=1 // pred_check_branch
      %55 = sbr.rel (0) target = $region17
    $region16: #{tpu_custom_call.1} parent=1 // pred_region
      %56 = dma.done [#allocation10], 512
    $region17: #{tpu_custom_call.1} parent=1 // pred_fallthru
      _
    %s57 = sadd.s32 0, 0
    %p58 = scmp.lt.s32.totalorder %s57, 0
    %s59 = scalar_select %p58, %s57, 0
    %s60 = smul.u32 4, %s59
    %s61 = sadd.s32 0, 0
    %p62 = scmp.lt.s32.totalorder %s61, 0
    %s63 = scalar_select %p62, %s61, 0
    %s64 = smul.u32 4, %s63
    %p65 = scmp.eq.s32.totalorder 0, 0
    // Predicated region
    $region18: #{tpu_custom_call.1} parent=1 // pred_check
      %p66 = pneg %p65
    $region19: #{tpu_custom_call.1} parent=1 // pred_check_branch
      %68 = sbr.rel (%p66) target = $region21
    $region20: #{tpu_custom_call.1} parent=1 // pred_region
      %69 = vst [vmem:[#allocation2] sm:$0xff] 0.0
      %70 = vst [vmem:[#allocation3] sm:$0xff] 0.0
    $region21: #{tpu_custom_call.1} parent=1 // pred_fallthru
      _
    %s71 = sadd.s32 0, 0
    %s72 = smul.u32 %s71, 32
    %s73 = sld [smem:[#allocation5]]
    %s74 = sld [smem:[#allocation5 + $0x1]]
    %s75 = sadd.s32 %s72, 32
    %p76 = scmp.gt.s32.totalorder %s75, %s73
    // Predicated region
    $region22: #{tpu_custom_call.1} parent=1 // pred_check
      %p77 = pneg %p76
    $region23: #{tpu_custom_call.1} parent=1 // pred_check_branch
      %79 = sbr.rel (%p77) target = $region25
    $region24: #{tpu_custom_call.1} parent=1 // pred_region
      %v80 = vld [vmem:[#allocation6] sm:$0xff]
      %v81 = vld [vmem:[#allocation6 + $0x8] sm:$0xff]
      %v82 = vld [vmem:[#allocation6 + $0x10] sm:$0xff]
      %v83 = vld [vmem:[#allocation6 + $0x18] sm:$0xff]
      %v84 = vld [vmem:[#allocation9] sm:$0xff]
      %v85 = vld [vmem:[#allocation9 + $0x8] sm:$0xff]
      %v86 = vld [vmem:[#allocation9 + $0x10] sm:$0xff]
      %v87 = vld [vmem:[#allocation9 + $0x18] sm:$0xff]
      %v88 = vmul.f32 %v80, 1.442695
      %v89 = vpow.pop %v88
      %v90 = vmul.f32 %v81, 1.442695
      %v91 = vpow.pop %v90
      %v92 = vmul.f32 %v82, 1.442695
      %v93 = vpow.pop %v92
      %v94 = vmul.f32 %v83, 1.442695
      %v95 = vpow.pop %v94
      %v96 = vadd.f32 %v89, 1.0
      %v97 = vadd.f32 %v91, 1.0
      %v98 = vadd.f32 %v93, 1.0
      %v99 = vadd.f32 %v95, 1.0
      %v100 = vrcp.pop %v96
      %v101 = vrcp.pop %v97
      %v102 = vrcp.pop %v98
      %v103 = vrcp.pop %v99
      %v104 = vsub.f32 1.0, %v84
      %v105 = vsub.f32 1.0, %v85
      %v106 = vsub.f32 1.0, %v86
      %v107 = vsub.f32 1.0, %v87
      %s108 = sadd.s32 %s72, 0
      %v109 = vlaneseq
      %v110 = vshrl.u32 %v109, 7
      %v111 = vadd.s32 %v110, 8
      %v112 = vadd.s32 %v110, 16
      %v113 = vadd.s32 %v110, 24
      %v114 = vstv %s108
      %v115 = vadd.s32 %v114, %v110
      %v116 = vadd.s32 %v114, %v111
      %v117 = vadd.s32 %v114, %v112
      %v118 = vadd.s32 %v114, %v113
      %v119 = vlaneseq
      %v120 = vand.u32 %v119, 127
      %v121 = vstv %s73
      %vm122 = vcmp.lt.s32.totalorder %v115, %v121
      %vm123 = vcmp.lt.s32.totalorder %v116, %v121
      %vm124 = vcmp.lt.s32.totalorder %v117, %v121
      %vm125 = vcmp.lt.s32.totalorder %v118, %v121
      %vm126 = vcmp.eq.s32.totalorder %v115, %v121
      %vm127 = vcmp.eq.s32.totalorder %v116, %v121
      %vm128 = vcmp.eq.s32.totalorder %v117, %v121
      %vm129 = vcmp.eq.s32.totalorder %v118, %v121
      %v130 = vstv %s74
      %vm131 = vcmp.lt.s32.totalorder %v120, %v130
      %vm132 = vmand %vm126, %vm131
      %vm133 = vmand %vm127, %vm131
      %vm134 = vmand %vm128, %vm131
      %vm135 = vmand %vm129, %vm131
      %vm136 = vmor %vm122, %vm132
      %vm137 = vmor %vm123, %vm133
      %vm138 = vmor %vm124, %vm134
      %vm139 = vmor %vm125, %vm135
      %v140 = vsel %vm136, %v100, 0.0
      %v141 = vsel %vm137, %v101, 0.0
      %v142 = vsel %vm138, %v102, 0.0
      %v143 = vsel %vm139, %v103, 0.0
      %v144 = vsel %vm136, %v104, 0.0
      %v145 = vsel %vm137, %v105, 0.0
      %v146 = vsel %vm138, %v106, 0.0
      %v147 = vsel %vm139, %v107, 0.0
      %v148 = vmul.f32 %v140, %v144
      %v149 = vmul.f32 %v141, %v145
      %v150 = vmul.f32 %v142, %v146
      %v151 = vmul.f32 %v143, %v147
      %v152 = vadd.f32 %v140, %v144
      %v153 = vadd.f32 %v141, %v145
      %v154 = vadd.f32 %v142, %v146
      %v155 = vadd.f32 %v143, %v147
      %v156 = vadd.f32 %v148, %v149
      %v157 = vadd.f32 %v156, %v150
      %v158 = vadd.f32 %v157, %v151
      %v159 = vadd.f32 %v158, 0.0
      %v160 = vadd.f32 %v152, %v153
      %v161 = vadd.f32 %v160, %v154
      %v162 = vadd.f32 %v161, %v155
      %v163 = vadd.f32 %v162, 0.0
      %v164 = vld [vmem:[#allocation2] sm:$0xff]
      %v165 = vadd.f32 %v164, %v159
      %166 = vst [vmem:[#allocation2] sm:$0xff] %v165
      %v167 = vld [vmem:[#allocation3] sm:$0xff]
      %v168 = vadd.f32 %v167, %v163
      %169 = vst [vmem:[#allocation3] sm:$0xff] %v168
    $region25: #{tpu_custom_call.1} parent=1 // pred_fallthru
      _
    %p170 = scmp.le.s32.totalorder %s75, %s73
    // Predicated region
    $region26: #{tpu_custom_call.1} parent=1 // pred_check
      %p171 = pneg %p170
    $region27: #{tpu_custom_call.1} parent=1 // pred_check_branch
      %173 = sbr.rel (%p171) target = $region29
    $region28: #{tpu_custom_call.1} parent=1 // pred_region
      %v174 = vld [vmem:[#allocation6] sm:$0xff]
      %v175 = vld [vmem:[#allocation6 + $0x8] sm:$0xff]
      %v176 = vld [vmem:[#allocation6 + $0x10] sm:$0xff]
      %v177 = vld [vmem:[#allocation6 + $0x18] sm:$0xff]
      %v178 = vld [vmem:[#allocation9] sm:$0xff]
      %v179 = vld [vmem:[#allocation9 + $0x8] sm:$0xff]
      %v180 = vld [vmem:[#allocation9 + $0x10] sm:$0xff]
      %v181 = vld [vmem:[#allocation9 + $0x18] sm:$0xff]
      %v182 = vmul.f32 %v174, 1.442695
      %v183 = vpow.pop %v182
      %v184 = vmul.f32 %v175, 1.442695
      %v185 = vpow.pop %v184
      %v186 = vmul.f32 %v176, 1.442695
      %v187 = vpow.pop %v186
      %v188 = vmul.f32 %v177, 1.442695
      %v189 = vpow.pop %v188
      %v190 = vadd.f32 %v183, 1.0
      %v191 = vadd.f32 %v185, 1.0
      %v192 = vadd.f32 %v187, 1.0
      %v193 = vadd.f32 %v189, 1.0
      %v194 = vrcp.pop %v190
      %v195 = vrcp.pop %v191
      %v196 = vrcp.pop %v192
      %v197 = vrcp.pop %v193
      %v198 = vsub.f32 1.0, %v178
      %v199 = vsub.f32 1.0, %v179
      %v200 = vsub.f32 1.0, %v180
      %v201 = vsub.f32 1.0, %v181
      %v202 = vmul.f32 %v194, %v198
      %v203 = vmul.f32 %v195, %v199
      %v204 = vmul.f32 %v196, %v200
      %v205 = vmul.f32 %v197, %v201
      %v206 = vadd.f32 %v194, %v198
      %v207 = vadd.f32 %v195, %v199
      %v208 = vadd.f32 %v196, %v200
      %v209 = vadd.f32 %v197, %v201
      %v210 = vadd.f32 %v202, %v203
      %v211 = vadd.f32 %v210, %v204
      %v212 = vadd.f32 %v211, %v205
      %v213 = vadd.f32 %v212, 0.0
      %v214 = vadd.f32 %v206, %v207
      %v215 = vadd.f32 %v214, %v208
      %v216 = vadd.f32 %v215, %v209
      %v217 = vadd.f32 %v216, 0.0
      %v218 = vld [vmem:[#allocation2] sm:$0xff]
      %v219 = vadd.f32 %v218, %v213
      %220 = vst [vmem:[#allocation2] sm:$0xff] %v219
      %v221 = vld [vmem:[#allocation3] sm:$0xff]
      %v222 = vadd.f32 %v221, %v217
      %223 = vst [vmem:[#allocation3] sm:$0xff] %v222
    $region29: #{tpu_custom_call.1} parent=1 // pred_fallthru
      _
    // Predicated region
    $region30: #{tpu_custom_call.1} parent=1 // pred_check
      %p224 = pneg %p65
    $region31: #{tpu_custom_call.1} parent=1 // pred_check_branch
      %226 = sbr.rel (%p224) target = $region33
    $region32: #{tpu_custom_call.1} parent=1 // pred_region
      %v227 = vld [vmem:[#allocation2] sm:$0xff]
      %228 = vadd.xlane.f32.xlu0 %v227
      %v229 = vpop.xlane.xlu0 %228
      %v230 = vrot.slane %v229, 4
      %v231 = vadd.f32 %v229, %v230
      %v232 = vrot.slane %v231, 2
      %v233 = vadd.f32 %v231, %v232
      %v234 = vrot.slane %v233, 1
      %v235 = vadd.f32 %v233, %v234
      %s236 = vtos %v235
      %s237 = scalar_lea.smem [#allocation11], 0
      %238 = sst [smem:[%s237]] %s236
      %v239 = vld [vmem:[#allocation3] sm:$0xff]
      %240 = vadd.xlane.f32.xlu0 %v239
      %v241 = vpop.xlane.xlu0 %240
      %v242 = vrot.slane %v241, 4
      %v243 = vadd.f32 %v241, %v242
      %v244 = vrot.slane %v243, 2
      %v245 = vadd.f32 %v243, %v244
      %v246 = vrot.slane %v245, 1
      %v247 = vadd.f32 %v245, %v246
      %s248 = vtos %v247
      %s249 = scalar_lea.smem [#allocation11], 1
      %250 = sst [smem:[%s249]] %s248
    $region33: #{tpu_custom_call.1} parent=1 // pred_fallthru
      _
    // Predicated region
    $region34: #{tpu_custom_call.1} parent=1 // pred_check
      _
    $region35: #{tpu_custom_call.1} parent=1 // pred_check_branch
      %252 = sbr.rel (0) target = $region37
    $region36: #{tpu_custom_call.1} parent=1 // pred_region
      %s254 = ssub.s32 16, 16
      %255 = vsyncadd [#allocation8], %s254
      %258 = dma.smem_to_hbm [#allocation11], 16, %s3, [#allocation8]
    $region37: #{tpu_custom_call.1} parent=1 // pred_fallthru
      _
    // Predicated region
    $region38: #{tpu_custom_call.1} parent=1 // pred_check
      _
    $region39: #{tpu_custom_call.1} parent=1 // pred_check_branch
      %260 = sbr.rel (0) target = $region41
    $region40: #{tpu_custom_call.1} parent=1 // pred_region
      %261 = dma.done [#allocation8], 16
    $region41: #{tpu_custom_call.1} parent=1 // pred_fallthru
      _
    %262 = sfence
    %263 = vsyncpa [#allocation7], 1
    %264 = vsyncpa [#allocation10], 1
    %265 = vsyncpa [#allocation8], 1

</llo_original>
